<compile_context>
chip_gen: v5e
topology: v5e:2x2
jax: 0.10.0
libtpu: 0.0.40
codegen_flags: <defaults>
</compile_context>

<pallas_src>
import math

import jax
import jax.numpy as jnp
from jax.experimental import pallas as pl
from jax.experimental.pallas import tpu as pltpu

LANE = 128     # TPU vreg lane width
SUBLANE = 8    # f32 sublane count (VMEM padding of (1, tn) IO blocks)


def mlp_kernel(x_ref, w1_ref, b1_ref, w2_ref, b2_ref, w3_ref, b3_ref, o_ref):
    """One lane tile: x (1, TN) -> out (1, TN).  Batch lives on the lane axis."""
    x = x_ref[...]                                                   # (1, TN)
    # fc1: contraction dim is 1 -> pure VPU broadcast multiply-add (no MXU).
    h1 = jnp.maximum(w1_ref[...] * x + b1_ref[...], 0.0)             # (20, TN)
    # fc2: the only real matmul; MXU with f32 accumulation.
    # TODO(synk): bf16 operands here would cut vmatmul pushes ~3x but break
    # the 1e-5 f32 allclose below, so operands stay f32.
    h2 = jnp.dot(w2_ref[...], h1,
                 preferred_element_type=jnp.float32) + b2_ref[...]
    h2 = jnp.maximum(h2, 0.0)                                        # (10, TN)
    # fc3 (M=1, K=10) off the MXU: VPU multiply by lane-broadcast w3 column,
    # then XLU sublane reduction over the 10 feature rows.
    out = jnp.sum(w3_ref[...] * h2, axis=0, keepdims=True) + b3_ref[...]
    o_ref[...] = out.astype(o_ref.dtype)                             # (1, TN)


def fnn_forward(y_p, params, *, tn=8192):
    """y_p: (N, 1) float32.  params: weights stored (out, in), biases (out, 1)."""
    w1, b1 = params["w1"], params["b1"]   # (20, 1), (20, 1)
    w2, b2 = params["w2"], params["b2"]   # (10, 20), (10, 1)
    w3, b3 = params["w3"], params["b3"]   # (1, 10), (1, 1)
    w3c = w3.reshape(10, 1)               # column form for the VPU/XLU fc3

    N = y_p.shape[0]
    n_lanes = pl.cdiv(N, LANE) * LANE          # lane-rounded batch extent

    # Lane-tile selection:
    #  * round the requested tile to a lane multiple and cap at the batch,
    #  * keep >= 2 grid steps when possible so the "parallel" axis can shard
    #    across both v7x TensorCores.
    tn = max(LANE, (min(tn, n_lanes) // LANE) * LANE)
    if n_lanes >= 2 * LANE:
        half = pl.cdiv(n_lanes // 2, LANE) * LANE
        tn = min(tn, half)
    grid = pl.cdiv(N, tn)

    # Batch on the lane axis; no pad/slice HBM passes.  Reshape (N,1)->(1,N)
    # is layout-free.
    x = y_p.astype(jnp.float32).reshape(1, N)

    full = lambda arr: pl.BlockSpec(arr.shape, lambda i: (0, 0))

    # Per-step VMEM estimate: double-buffered (1, tn) IO blocks pad to 8
    # sublanes (2 * 2 * 8 * tn * 4 B) + h1/h2 intermediates (30 * tn * 4 B)
    # + ~2 KiB of weights.  Only set an explicit limit for very large tiles
    # (v5e's scoped-VMEM default is 16 MiB).
    vmem_est = 2 * 2 * SUBLANE * tn * 4 + 30 * tn * 4 + (1 << 20)
    compiler_kwargs = dict(dimension_semantics=("parallel",))
    if vmem_est > 12 * 1024 * 1024:
        compiler_kwargs["vmem_limit_bytes"] = min(2 * vmem_est, 64 * 1024 * 1024)

    out = pl.pallas_call(
        mlp_kernel,
        out_shape=jax.ShapeDtypeStruct((1, N), jnp.float32),
        grid_spec=pltpu.PrefetchScalarGridSpec(
            num_scalar_prefetch=0,
            grid=(grid,),
            in_specs=[
                pl.BlockSpec((1, tn), lambda i: (0, i)),   # x tile (lane-dense)
                full(w1), full(b1),
                full(w2), full(b2),
                full(w3c), full(b3),
            ],
            out_specs=pl.BlockSpec((1, tn), lambda i: (0, i)),
        ),
        compiler_params=pltpu.CompilerParams(**compiler_kwargs),
    )(x, w1, b1, w2, b2, w3c, b3)

    return out.reshape(N, 1)


def xavier_uniform(key, fan_in, fan_out):
    # matches torch.nn.init.xavier_uniform_ (gain=1); stored (out, in) like PyTorch.
    limit = math.sqrt(6.0 / (fan_in + fan_out))
    return jax.random.uniform(key, (fan_out, fan_in), jnp.float32, -limit, limit)


def init_params(key):
    k1, k2, k3 = jax.random.split(key, 3)
    return {
        "w1": xavier_uniform(k1, 1, 20),  "b1": jnp.zeros((20, 1), jnp.float32),
        "w2": xavier_uniform(k2, 20, 10), "b2": jnp.zeros((10, 1), jnp.float32),
        "w3": xavier_uniform(k3, 10, 1),  "b3": jnp.zeros((1, 1), jnp.float32),
    }


def fnn_reference(y_p, p):
    # Pure-JAX reference with the same (out, in) weight layout.
    h1 = jnp.maximum(y_p @ p["w1"].T + p["b1"].T, 0.0)
    h2 = jnp.maximum(h1 @ p["w2"].T + p["b2"].T, 0.0)
    return h2 @ p["w3"].T + p["b3"].T


if __name__ == "__main__":
    key = jax.random.PRNGKey(0)
    k_param, k_x = jax.random.split(key)
    params = init_params(k_param)

    # N=1000 exercises the masked ragged edge tile; N=4096 the clean
    # multi-step (megacore-sharded) path.
    for N in (1000, 4096):
        y_p = jax.random.normal(jax.random.fold_in(k_x, N), (N, 1), jnp.float32)
        out = jax.block_until_ready(fnn_forward(y_p, params))
        ref = fnn_reference(y_p, params)
        assert out.shape == (N, 1)
        assert jnp.allclose(out, ref, atol=1e-5, rtol=1e-5), f"mismatch vs reference at N={N}"

    print("KERNEL_OK")
</pallas_src>

<mosaic_0001>
module attributes {stable_mosaic.version = 11 : i64} {
  func.func @mlp_kernel(%arg0: i32, %arg1: memref<1x512xf32, #tpu.memory_space<vmem>>, %arg2: memref<20x1xf32, #tpu.memory_space<vmem>>, %arg3: memref<20x1xf32, #tpu.memory_space<vmem>>, %arg4: memref<10x20xf32, #tpu.memory_space<vmem>>, %arg5: memref<10x1xf32, #tpu.memory_space<vmem>>, %arg6: memref<10x1xf32, #tpu.memory_space<vmem>>, %arg7: memref<1x1xf32, #tpu.memory_space<vmem>>, %arg8: memref<1x512xf32, #tpu.memory_space<vmem>>) attributes {dimension_semantics = [#tpu.dimension_semantics<parallel>], iteration_bounds = array<i64: 2>, scalar_prefetch = 0 : i64, scratch_operands = 0 : i64, tpu.core_type = #tpu.core_type<tc>, window_params = [{transform_indices = @transform_0, window_bounds = array<i64: 1, 512>}, {pipeline_mode = #tpu.pipeline_mode<synchronous>, transform_indices = @transform_1, window_bounds = array<i64: 20, 1>}, {pipeline_mode = #tpu.pipeline_mode<synchronous>, transform_indices = @transform_2, window_bounds = array<i64: 20, 1>}, {pipeline_mode = #tpu.pipeline_mode<synchronous>, transform_indices = @transform_3, window_bounds = array<i64: 10, 20>}, {pipeline_mode = #tpu.pipeline_mode<synchronous>, transform_indices = @transform_4, window_bounds = array<i64: 10, 1>}, {pipeline_mode = #tpu.pipeline_mode<synchronous>, transform_indices = @transform_5, window_bounds = array<i64: 10, 1>}, {pipeline_mode = #tpu.pipeline_mode<synchronous>, transform_indices = @transform_6, window_bounds = array<i64: 1, 1>}, {transform_indices = @transform_7, window_bounds = array<i64: 1, 512>}]} {
    %c0 = arith.constant 0 : index
    %c0_0 = arith.constant 0 : index
    %0 = vector.load %arg1[%c0, %c0_0] : memref<1x512xf32, #tpu.memory_space<vmem>>, vector<1x512xf32>
    %c0_1 = arith.constant 0 : index
    %c0_2 = arith.constant 0 : index
    %1 = vector.load %arg2[%c0_1, %c0_2] : memref<20x1xf32, #tpu.memory_space<vmem>>, vector<20x1xf32>
    %2 = vector.broadcast %1 : vector<20x1xf32> to vector<20x512xf32>
    %3 = vector.broadcast %0 : vector<1x512xf32> to vector<20x512xf32>
    %4 = arith.mulf %2, %3 : vector<20x512xf32>
    %c0_3 = arith.constant 0 : index
    %c0_4 = arith.constant 0 : index
    %5 = vector.load %arg3[%c0_3, %c0_4] : memref<20x1xf32, #tpu.memory_space<vmem>>, vector<20x1xf32>
    %6 = vector.broadcast %5 : vector<20x1xf32> to vector<20x512xf32>
    %7 = arith.addf %4, %6 : vector<20x512xf32>
    %cst = arith.constant 0.000000e+00 : f32
    %8 = vector.broadcast %cst : f32 to vector<20x512xf32>
    %9 = arith.maximumf %7, %8 : vector<20x512xf32>
    %c0_5 = arith.constant 0 : index
    %c0_6 = arith.constant 0 : index
    %10 = vector.load %arg4[%c0_5, %c0_6] : memref<10x20xf32, #tpu.memory_space<vmem>>, vector<10x20xf32>
    %cst_7 = arith.constant dense<0.000000e+00> : vector<10x512xf32>
    %11 = tpu.matmul %10, %9, %cst_7 {dimension_numbers = #tpu.dot_dimension_numbers<[1], [0], [0], [1], [0, 0, 1, 1], [], []>} : vector<10x20xf32>, vector<20x512xf32>, vector<10x512xf32> -> vector<10x512xf32>
    %c0_8 = arith.constant 0 : index
    %c0_9 = arith.constant 0 : index
    %12 = vector.load %arg5[%c0_8, %c0_9] : memref<10x1xf32, #tpu.memory_space<vmem>>, vector<10x1xf32>
    %13 = vector.broadcast %12 : vector<10x1xf32> to vector<10x512xf32>
    %14 = arith.addf %11, %13 : vector<10x512xf32>
    %cst_10 = arith.constant 0.000000e+00 : f32
    %15 = vector.broadcast %cst_10 : f32 to vector<10x512xf32>
    %16 = arith.maximumf %14, %15 : vector<10x512xf32>
    %c0_11 = arith.constant 0 : index
    %c0_12 = arith.constant 0 : index
    %17 = vector.load %arg6[%c0_11, %c0_12] : memref<10x1xf32, #tpu.memory_space<vmem>>, vector<10x1xf32>
    %18 = vector.broadcast %17 : vector<10x1xf32> to vector<10x512xf32>
    %19 = arith.mulf %18, %16 : vector<10x512xf32>
    %cst_13 = arith.constant dense<0.000000e+00> : vector<512xf32>
    %20 = vector.multi_reduction <add>, %19, %cst_13 [0] : vector<10x512xf32> to vector<512xf32>
    %21 = vector.shape_cast %20 : vector<512xf32> to vector<1x512xf32>
    %c0_14 = arith.constant 0 : index
    %c0_15 = arith.constant 0 : index
    %22 = vector.load %arg7[%c0_14, %c0_15] : memref<1x1xf32, #tpu.memory_space<vmem>>, vector<1x1xf32>
    %23 = vector.broadcast %22 : vector<1x1xf32> to vector<1x512xf32>
    %24 = arith.addf %21, %23 : vector<1x512xf32>
    %c0_16 = arith.constant 0 : index
    %c0_17 = arith.constant 0 : index
    %25 = vector.load %arg8[%c0_16, %c0_17] : memref<1x512xf32, #tpu.memory_space<vmem>>, vector<1x512xf32>
    tpu.vector_store %arg8[%c0_16, %c0_17], %24 {strides = array<i32>} : memref<1x512xf32, #tpu.memory_space<vmem>>, vector<1x512xf32>,
    return
  }
  func.func @transform_0(%arg0: i32) -> (i32, i32) {
    %c0_i32 = arith.constant 0 : i32
    %c0_i32_0 = arith.constant 0 : i32
    return %c0_i32, %arg0 : i32, i32
  }
  func.func @transform_1(%arg0: i32) -> (i32, i32) {
    %c0_i32 = arith.constant 0 : i32
    %c0_i32_0 = arith.constant 0 : i32
    %c0_i32_1 = arith.constant 0 : i32
    return %c0_i32, %c0_i32_0 : i32, i32
  }
  func.func @transform_2(%arg0: i32) -> (i32, i32) {
    %c0_i32 = arith.constant 0 : i32
    %c0_i32_0 = arith.constant 0 : i32
    %c0_i32_1 = arith.constant 0 : i32
    return %c0_i32, %c0_i32_0 : i32, i32
  }
  func.func @transform_3(%arg0: i32) -> (i32, i32) {
    %c0_i32 = arith.constant 0 : i32
    %c0_i32_0 = arith.constant 0 : i32
    %c0_i32_1 = arith.constant 0 : i32
    return %c0_i32, %c0_i32_0 : i32, i32
  }
  func.func @transform_4(%arg0: i32) -> (i32, i32) {
    %c0_i32 = arith.constant 0 : i32
    %c0_i32_0 = arith.constant 0 : i32
    %c0_i32_1 = arith.constant 0 : i32
    return %c0_i32, %c0_i32_0 : i32, i32
  }
  func.func @transform_5(%arg0: i32) -> (i32, i32) {
    %c0_i32 = arith.constant 0 : i32
    %c0_i32_0 = arith.constant 0 : i32
    %c0_i32_1 = arith.constant 0 : i32
    return %c0_i32, %c0_i32_0 : i32, i32
  }
  func.func @transform_6(%arg0: i32) -> (i32, i32) {
    %c0_i32 = arith.constant 0 : i32
    %c0_i32_0 = arith.constant 0 : i32
    %c0_i32_1 = arith.constant 0 : i32
    return %c0_i32, %c0_i32_0 : i32, i32
  }
  func.func @transform_7(%arg0: i32) -> (i32, i32) {
    %c0_i32 = arith.constant 0 : i32
    %c0_i32_0 = arith.constant 0 : i32
    return %c0_i32, %arg0 : i32, i32
  }
}

</mosaic_0001>

<llo_original>
// kernel: tpu_custom_call.1
$region0: #{tpu_custom_call.1}
  #allocation0 [shape = 'u32[]', space=smem, size = 0x4, offset = 0x4, fixed_abs, tag = 'smem constant byte address 0x4 - core index']
  #allocation1 [shape = 'u32[72,128]{1,0:T(1,128)}', space=vmem, size = 0x9000, scoped, tag = 'internal scratch']
  #allocation2 [shape = 'f32[1,1]{1,0:T(1,128)S(1)}', space=vmem, size = 0x200, scoped, tag = 'scoped memory for tpu_custom_call.1']
  %s0 = inlined_call_operand.vmem [shape: f32[1,1000], index: 0, kind: input, shape index: {}]
  %s1 = inlined_call_operand.vmem [shape: f32[20,1], index: 1, kind: input, shape index: {}]
  %s2 = inlined_call_operand.vmem [shape: f32[20,1], index: 2, kind: input, shape index: {}]
  %s3 = inlined_call_operand.vmem [shape: f32[10,20], index: 3, kind: input, shape index: {}]
  %s4 = inlined_call_operand.vmem [shape: f32[10,1], index: 4, kind: input, shape index: {}]
  %s5 = inlined_call_operand.vmem [shape: f32[10,1], index: 5, kind: input, shape index: {}]
  %s6 = inlined_call_operand.<no memory space> [shape: f32[1,1], index: 6, kind: input, shape index: {}]
  %s7 = inlined_call_operand.hbm [shape: f32[1,1000], index: 7, kind: output, shape index: {}]
  %s8 = sld [smem:[#allocation0]]
  $region61: #{tpu_custom_call.1} parent=0
    _
  %s10 = ssub.s32 1, %s8
  %s11 = scalar_select 0, %s10, %s8
  %v12 = vstv %s6
  %13 = vst [vmem:[#allocation2] sm:$0x1] %v12
  $region1: #{tpu_custom_call.1} parent=0
    #allocation3 [shape = 'u8[4096]{0}', space=vmem, size = 0x1000, scoped, tag = 'output window, operand 0']
    #allocation4 [shape = 's32[2]{0}', space=sflag, size = 0x8, scoped, tag = 'scoped memory for tpu_custom_call.1']
    %14 = vsyncpa [#allocation4], 0
    %s15 = scalar_lea.sflag [#allocation4], 1
    %16 = vsyncpa %s15, 0
    loop: start=0, step=1, limit=4
    $region2: #{tpu_custom_call.1} parent=1 // loop_pre_header
      _
    $region3: #{tpu_custom_call.1} parent=1 // loop_header
      %s18 = sphi 0, %s22
      %p19 = scmp.ge.s32.totalorder %s18, 4
      %s28 = sphi 0, %s30
      %s31 = sphi 0, %s28
      %s32 = sphi 0, %s31
      %s48 = sphi 0, %s32
      %s52 = sphi 0, %s52
      %s54 = sphi 0, %s52
      %s55 = sphi 0, %s54
      %s69 = sphi 0, %s55
      %s73 = sphi 0, %s73
      %s75 = sphi 0, %s73
      %s76 = sphi 0, %s75
      %s90 = sphi 0, %s76
      %s94 = sphi 0, %s94
      %s96 = sphi 0, %s94
      %s97 = sphi 0, %s96
      %s111 = sphi 0, %s97
      %s115 = sphi 0, %s115
      %s117 = sphi 0, %s115
      %s118 = sphi 0, %s117
      %s132 = sphi 0, %s118
      %s136 = sphi 0, %s136
      %s138 = sphi 0, %s136
      %s139 = sphi 0, %s138
      %s153 = sphi 0, %s139
      %s157 = sphi 0, %s157
      %s159 = sphi 0, %s157
      %s160 = sphi 0, %s159
      %s174 = sphi 0, %s160
      %s180 = sphi 0, %s182
      %s183 = sphi 0, %s180
      %s184 = sphi 0, %s183
      %s200 = sphi 0, %s184
    $region4: #{tpu_custom_call.1} parent=1 // loop_header_branch
      %21 = sbr.rel (%p19) target = $region8
    $region5: #{tpu_custom_call.1} parent=1 // loop_body
      %s23 = ssub.s32 %s18, 1
      %s24 = ssub.s32 %s18, 2
      %s25 = sadd.s32 %s18, 1
      %s26 = ssub.s32 %s18, %s25
      %p27 = scmp.eq.s32.totalorder %s26, 0
      %s29 = sadd.s32 %s28, 1
      %s30 = scalar_select %p27, %s28, %s29
      %p33 = pneg %p27
      %p34 = scmp.eq.s32.totalorder %s18, 1
      %p35 = por %p33, %p34
      %p36 = scmp.ne.s32.totalorder %s28, %s31
      %p37 = scmp.eq.s32.totalorder %s18, 0
      %p38 = por %p36, %p37
      %p39 = scmp.ne.s32.totalorder %s28, %s31
      %p40 = scmp.eq.s32.totalorder %s23, 1
      %p41 = por %p39, %p40
      %p42 = scmp.ne.s32.totalorder %s31, %s32
      %p43 = scmp.eq.s32.totalorder %s23, 0
      %p44 = por %p42, %p43
      %p45 = scmp.ne.s32.totalorder %s31, %s32
      %p46 = scmp.eq.s32.totalorder %s24, 1
      %p47 = por %p45, %p46
      %p49 = scmp.ne.s32.totalorder %s32, %s48
      %p50 = scmp.eq.s32.totalorder %s24, 0
      %p51 = por %p49, %p50
      %s53 = sadd.s32 %s52, 1
      %p56 = scmp.eq.s32.totalorder %s18, 1
      %p57 = scmp.ne.s32.totalorder %s52, %s54
      %p58 = scmp.eq.s32.totalorder %s18, 0
      %p59 = por %p57, %p58
      %p60 = scmp.ne.s32.totalorder %s52, %s54
      %p61 = scmp.eq.s32.totalorder %s23, 1
      %p62 = por %p60, %p61
      %p63 = scmp.ne.s32.totalorder %s54, %s55
      %p64 = scmp.eq.s32.totalorder %s23, 0
      %p65 = por %p63, %p64
      %p66 = scmp.ne.s32.totalorder %s54, %s55
      %p67 = scmp.eq.s32.totalorder %s24, 1
      %p68 = por %p66, %p67
      %p70 = scmp.ne.s32.totalorder %s55, %s69
      %p71 = scmp.eq.s32.totalorder %s24, 0
      %p72 = por %p70, %p71
      %s74 = sadd.s32 %s73, 1
      %p77 = scmp.eq.s32.totalorder %s18, 1
      %p78 = scmp.ne.s32.totalorder %s73, %s75
      %p79 = scmp.eq.s32.totalorder %s18, 0
      %p80 = por %p78, %p79
      %p81 = scmp.ne.s32.totalorder %s73, %s75
      %p82 = scmp.eq.s32.totalorder %s23, 1
      %p83 = por %p81, %p82
      %p84 = scmp.ne.s32.totalorder %s75, %s76
      %p85 = scmp.eq.s32.totalorder %s23, 0
      %p86 = por %p84, %p85
      %p87 = scmp.ne.s32.totalorder %s75, %s76
      %p88 = scmp.eq.s32.totalorder %s24, 1
      %p89 = por %p87, %p88
      %p91 = scmp.ne.s32.totalorder %s76, %s90
      %p92 = scmp.eq.s32.totalorder %s24, 0
      %p93 = por %p91, %p92
      %s95 = sadd.s32 %s94, 1
      %p98 = scmp.eq.s32.totalorder %s18, 1
      %p99 = scmp.ne.s32.totalorder %s94, %s96
      %p100 = scmp.eq.s32.totalorder %s18, 0
      %p101 = por %p99, %p100
      %p102 = scmp.ne.s32.totalorder %s94, %s96
      %p103 = scmp.eq.s32.totalorder %s23, 1
      %p104 = por %p102, %p103
      %p105 = scmp.ne.s32.totalorder %s96, %s97
      %p106 = scmp.eq.s32.totalorder %s23, 0
      %p107 = por %p105, %p106
      %p108 = scmp.ne.s32.totalorder %s96, %s97
      %p109 = scmp.eq.s32.totalorder %s24, 1
      %p110 = por %p108, %p109
      %p112 = scmp.ne.s32.totalorder %s97, %s111
      %p113 = scmp.eq.s32.totalorder %s24, 0
      %p114 = por %p112, %p113
      %s116 = sadd.s32 %s115, 1
      %p119 = scmp.eq.s32.totalorder %s18, 1
      %p120 = scmp.ne.s32.totalorder %s115, %s117
      %p121 = scmp.eq.s32.totalorder %s18, 0
      %p122 = por %p120, %p121
      %p123 = scmp.ne.s32.totalorder %s115, %s117
      %p124 = scmp.eq.s32.totalorder %s23, 1
      %p125 = por %p123, %p124
      %p126 = scmp.ne.s32.totalorder %s117, %s118
      %p127 = scmp.eq.s32.totalorder %s23, 0
      %p128 = por %p126, %p127
      %p129 = scmp.ne.s32.totalorder %s117, %s118
      %p130 = scmp.eq.s32.totalorder %s24, 1
      %p131 = por %p129, %p130
      %p133 = scmp.ne.s32.totalorder %s118, %s132
      %p134 = scmp.eq.s32.totalorder %s24, 0
      %p135 = por %p133, %p134
      %s137 = sadd.s32 %s136, 1
      %p140 = scmp.eq.s32.totalorder %s18, 1
      %p141 = scmp.ne.s32.totalorder %s136, %s138
      %p142 = scmp.eq.s32.totalorder %s18, 0
      %p143 = por %p141, %p142
      %p144 = scmp.ne.s32.totalorder %s136, %s138
      %p145 = scmp.eq.s32.totalorder %s23, 1
      %p146 = por %p144, %p145
      %p147 = scmp.ne.s32.totalorder %s138, %s139
      %p148 = scmp.eq.s32.totalorder %s23, 0
      %p149 = por %p147, %p148
      %p150 = scmp.ne.s32.totalorder %s138, %s139
      %p151 = scmp.eq.s32.totalorder %s24, 1
      %p152 = por %p150, %p151
      %p154 = scmp.ne.s32.totalorder %s139, %s153
      %p155 = scmp.eq.s32.totalorder %s24, 0
      %p156 = por %p154, %p155
      %s158 = sadd.s32 %s157, 1
      %p161 = scmp.eq.s32.totalorder %s18, 1
      %p162 = scmp.ne.s32.totalorder %s157, %s159
      %p163 = scmp.eq.s32.totalorder %s18, 0
      %p164 = por %p162, %p163
      %p165 = scmp.ne.s32.totalorder %s157, %s159
      %p166 = scmp.eq.s32.totalorder %s23, 1
      %p167 = por %p165, %p166
      %p168 = scmp.ne.s32.totalorder %s159, %s160
      %p169 = scmp.eq.s32.totalorder %s23, 0
      %p170 = por %p168, %p169
      %p171 = scmp.ne.s32.totalorder %s159, %s160
      %p172 = scmp.eq.s32.totalorder %s24, 1
      %p173 = por %p171, %p172
      %p175 = scmp.ne.s32.totalorder %s160, %s174
      %p176 = scmp.eq.s32.totalorder %s24, 0
      %p177 = por %p175, %p176
      %s178 = ssub.s32 %s18, %s25
      %p179 = scmp.eq.s32.totalorder %s178, 0
      %s181 = sadd.s32 %s180, 1
      %s182 = scalar_select %p179, %s180, %s181
      %p185 = pneg %p179
      %p186 = scmp.eq.s32.totalorder %s18, 1
      %p187 = por %p185, %p186
      %p188 = scmp.ne.s32.totalorder %s180, %s183
      %p189 = scmp.eq.s32.totalorder %s18, 0
      %p190 = por %p188, %p189
      %p191 = scmp.ne.s32.totalorder %s180, %s183
      %p192 = scmp.eq.s32.totalorder %s23, 1
      %p193 = por %p191, %p192
      %p194 = scmp.ne.s32.totalorder %s183, %s184
      %p195 = scmp.eq.s32.totalorder %s23, 0
      %p196 = por %p194, %p195
      %p197 = scmp.ne.s32.totalorder %s183, %s184
      %p198 = scmp.eq.s32.totalorder %s24, 1
      %p199 = por %p197, %p198
      %p201 = scmp.ne.s32.totalorder %s184, %s200
      %p202 = scmp.eq.s32.totalorder %s24, 0
      %p203 = por %p201, %p202
      %p204 = scmp.le.s32.totalorder 1, %s18
      %p205 = scmp.lt.s32.totalorder %s18, 3
      %p206 = pnand %p204, %p205
      %p207 = pneg %p206
      // Predicated region
      $region9: #{tpu_custom_call.1} parent=5 // pred_check
        _
      $region10: #{tpu_custom_call.1} parent=5 // pred_check_branch
        %209 = sbr.rel (%p206) target = $region12
      $region11: #{tpu_custom_call.1} parent=5 // pred_region
        %s210 = ssub.s32 %s18, 1
        // Predicated region
        $region13: #{tpu_custom_call.1} parent=11 // pred_check
          %p211 = pneg %p65
        $region14: #{tpu_custom_call.1} parent=11 // pred_check_branch
          %213 = sbr.rel (%p211) target = $region16
        $region15: #{tpu_custom_call.1} parent=11 // pred_region
          _
        $region16: #{tpu_custom_call.1} parent=11 // pred_fallthru
          _
        // Predicated region
        $region17: #{tpu_custom_call.1} parent=11 // pred_check
          %p214 = pneg %p86
        $region18: #{tpu_custom_call.1} parent=11 // pred_check_branch
          %216 = sbr.rel (%p214) target = $region20
        $region19: #{tpu_custom_call.1} parent=11 // pred_region
          _
        $region20: #{tpu_custom_call.1} parent=11 // pred_fallthru
          _
        // Predicated region
        $region21: #{tpu_custom_call.1} parent=11 // pred_check
          %p217 = pneg %p107
        $region22: #{tpu_custom_call.1} parent=11 // pred_check_branch
          %219 = sbr.rel (%p217) target = $region24
        $region23: #{tpu_custom_call.1} parent=11 // pred_region
          _
        $region24: #{tpu_custom_call.1} parent=11 // pred_fallthru
          _
        // Predicated region
        $region25: #{tpu_custom_call.1} parent=11 // pred_check
          %p220 = pneg %p128
        $region26: #{tpu_custom_call.1} parent=11 // pred_check_branch
          %222 = sbr.rel (%p220) target = $region28
        $region27: #{tpu_custom_call.1} parent=11 // pred_region
          _
        $region28: #{tpu_custom_call.1} parent=11 // pred_fallthru
          _
        // Predicated region
        $region29: #{tpu_custom_call.1} parent=11 // pred_check
          %p223 = pneg %p149
        $region30: #{tpu_custom_call.1} parent=11 // pred_check_branch
          %225 = sbr.rel (%p223) target = $region32
        $region31: #{tpu_custom_call.1} parent=11 // pred_region
          _
        $region32: #{tpu_custom_call.1} parent=11 // pred_fallthru
          _
        // Predicated region
        $region33: #{tpu_custom_call.1} parent=11 // pred_check
          %p226 = pneg %p170
        $region34: #{tpu_custom_call.1} parent=11 // pred_check_branch
          %228 = sbr.rel (%p226) target = $region36
        $region35: #{tpu_custom_call.1} parent=11 // pred_region
          _
        $region36: #{tpu_custom_call.1} parent=11 // pred_fallthru
          _
      $region12: #{tpu_custom_call.1} parent=5 // pred_fallthru
        _
      %p229 = scmp.lt.s32.totalorder %s18, 2
      // Predicated region
      $region37: #{tpu_custom_call.1} parent=5 // pred_check
        %p230 = pneg %p229
      $region38: #{tpu_custom_call.1} parent=5 // pred_check_branch
        %232 = sbr.rel (%p230) target = $region40
      $region39: #{tpu_custom_call.1} parent=5 // pred_region
        // Predicated region
        $region41: #{tpu_custom_call.1} parent=39 // pred_check
          %p233 = pneg %p38
        $region42: #{tpu_custom_call.1} parent=39 // pred_check_branch
          %235 = sbr.rel (%p233) target = $region44
        $region43: #{tpu_custom_call.1} parent=39 // pred_region
          %s236 = smul.u32 4, %s18
          %p237 = scmp.lt.s32.totalorder %s236, 7
          %s238 = scalar_select %p237, %s236, 7
          %s239 = scalar_lea.vmem %s0, %s238
          %s240 = smul.u32 4, %s18
        $region44: #{tpu_custom_call.1} parent=39 // pred_fallthru
          _
      $region40: #{tpu_custom_call.1} parent=5 // pred_fallthru
        _
      %p241 = scmp.le.s32.totalorder 1, %s18
      %p242 = scmp.lt.s32.totalorder %s18, 3
      %p243 = pnand %p241, %p242
      %p244 = pneg %p243
      // Predicated region
      $region45: #{tpu_custom_call.1} parent=5 // pred_check
        _
      $region46: #{tpu_custom_call.1} parent=5 // pred_check_branch
        %246 = sbr.rel (%p243) target = $region48
      $region47: #{tpu_custom_call.1} parent=5 // pred_region
        %s247 = ssub.s32 %s18, 1
        %s248 = smul.u32 4, %s23
        %p249 = scmp.lt.s32.totalorder %s248, 7
        %s250 = scalar_select %p249, %s248, 7
        %s251 = scalar_lea.vmem %s0, %s250
        %p252 = pneg %p44
        %p253 = pneg %p41
        %p254 = pneg %p65
        %p255 = pneg %p62
        %p256 = pneg %p86
        %p257 = pneg %p83
        %p258 = pneg %p107
        %p259 = pneg %p104
        %p260 = pneg %p128
        %p261 = pneg %p125
        %p262 = pneg %p149
        %p263 = pneg %p146
        %p264 = pneg %p170
        %p265 = pneg %p167
        %p266 = pneg %p196
        %p267 = pneg %p193
        %s268 = sand.u32 %s183, 1
        %s269 = scalar_lea.sflag [#allocation4], %s268
        %s270 = sand.u32 %s183, 1
        %s271 = smul.addr %s270, 4
        %s272 = scalar_lea.vmem [#allocation3], %s271
        %s273 = smul.u32 4, %s23
        %p274 = scmp.lt.s32.totalorder %s273, 7
        %s275 = scalar_select %p274, %s273, 7
        %s276 = scalar_lea.vmem %s0, %s275
        %s277 = smul.u32 4, %s23
        %s278 = smul.u32 4, %s23
        %v279 = vld [vmem:[%s276] sm:$0xf]
        %v280 = vld [vmem:[%s1] sm:$0xff]
        %v281 = vld [vmem:[%s1 + $0x8] sm:$0xff]
        %v282 = vld [vmem:[%s1 + $0x10] sm:$0xf]
        %284 = vset.pattern.permute.xlu0 0
        %285 = vperm.xlu0 %284, %v280
        %v286 = vpop.permute.xlu0 %285
        %289 = vset.pattern.permute.xlu0 0
        %290 = vperm.xlu0 %289, %v281
        %v291 = vpop.permute.xlu0 %290
        %294 = vset.pattern.permute.xlu0 0
        %295 = vperm.xlu0 %294, %v282
        %v296 = vpop.permute.xlu0 %295
        %v299 = vperm.slane %v279, 0
        %v300 = vperm.slane %v279, 1
        %v301 = vperm.slane %v279, 2
        %v302 = vperm.slane %v279, 3
        %v307 = vmul.f32 %v286, %v299
        %v308 = vmul.f32 %v286, %v300
        %v309 = vmul.f32 %v286, %v301
        %v310 = vmul.f32 %v286, %v302
        %v311 = vmul.f32 %v291, %v299
        %v312 = vmul.f32 %v291, %v300
        %v313 = vmul.f32 %v291, %v301
        %v314 = vmul.f32 %v291, %v302
        %v315 = vmul.f32 %v296, %v299
        %v316 = vmul.f32 %v296, %v300
        %v317 = vmul.f32 %v296, %v301
        %v318 = vmul.f32 %v296, %v302
        %v319 = vld [vmem:[%s2] sm:$0xff]
        %v320 = vld [vmem:[%s2 + $0x8] sm:$0xff]
        %v321 = vld [vmem:[%s2 + $0x10] sm:$0xf]
        %323 = vset.pattern.permute.xlu0 0
        %324 = vperm.xlu0 %323, %v319
        %v325 = vpop.permute.xlu0 %324
        %328 = vset.pattern.permute.xlu0 0
        %329 = vperm.xlu0 %328, %v320
        %v330 = vpop.permute.xlu0 %329
        %333 = vset.pattern.permute.xlu0 0
        %334 = vperm.xlu0 %333, %v321
        %v335 = vpop.permute.xlu0 %334
        %v337 = vadd.f32 %v307, %v325
        %v338 = vadd.f32 %v308, %v325
        %v339 = vadd.f32 %v309, %v325
        %v340 = vadd.f32 %v310, %v325
        %v341 = vadd.f32 %v311, %v330
        %v342 = vadd.f32 %v312, %v330
        %v343 = vadd.f32 %v313, %v330
        %v344 = vadd.f32 %v314, %v330
        %v345 = vadd.f32 %v315, %v335
        %v346 = vadd.f32 %v316, %v335
        %v347 = vadd.f32 %v317, %v335
        %v348 = vadd.f32 %v318, %v335
        %v349 = vmax.f32 %v337, 0.0
        %v350 = vmax.f32 %v338, 0.0
        %v351 = vmax.f32 %v339, 0.0
        %v352 = vmax.f32 %v340, 0.0
        %v353 = vmax.f32 %v341, 0.0
        %v354 = vmax.f32 %v342, 0.0
        %v355 = vmax.f32 %v343, 0.0
        %v356 = vmax.f32 %v344, 0.0
        %v357 = vmax.f32 %v345, 0.0
        %v358 = vmax.f32 %v346, 0.0
        %v359 = vmax.f32 %v347, 0.0
        %v360 = vmax.f32 %v348, 0.0
        %v361 = vld [vmem:[%s3] sm:$0xff]
        %v362 = vld [vmem:[%s3 + $0x8] sm:$0x3]
        %v363 = vld [vmem:[%s4] sm:$0xff]
        %v364 = vld [vmem:[%s4 + $0x8] sm:$0x3]
        %366 = vset.pattern.permute.xlu0 0
        %367 = vperm.xlu0 %366, %v363
        %v368 = vpop.permute.xlu0 %367
        %371 = vset.pattern.permute.xlu0 0
        %372 = vperm.xlu0 %371, %v364
        %v373 = vpop.permute.xlu0 %372
        %vm375 = vcmask 162816
        %v377 = vsel %vm375, %v361, 0
        %v380 = vsel %vm375, %v362, 0
        %vm382 = vcmask 1043456
        %v384 = vsel %vm382, %v357, 0
        %v387 = vsel %vm382, %v358, 0
        %v390 = vsel %vm382, %v359, 0
        %v393 = vsel %vm382, %v360, 0
        %395 = vmatpush.msra.mxu0 0.0
        %396 = vmatpush.msra.mxu0 0.0
        %397 = vmatpush.msra.mxu0 0.0
        %398 = vmatpush.msra.mxu0 0.0
        %399 = vmatpush.msra.mxu0 0.0
        %400 = vmatpush.msra.mxu0 0.0
        %401 = vmatpush.msra.mxu0 0.0
        %402 = vmatpush.msra.mxu0 0.0
        %403 = vmatpush.msra.mxu0 0.0
        %404 = vmatpush.msra.mxu0 0.0
        %405 = vmatpush.msra.mxu0 0.0
        %406 = vmatpush.msra.mxu0 0.0
        %407 = vmatpush.msra.mxu0 0.0
        %408 = vmatpush.msra.mxu0 %v384
        %409 = vmatpush.msra.mxu0 %v353
        %410 = vmatpush.msra.mxu0 %v349
        %411 = vmatmul.f32.gmra.mxu0 %v377
        %v412 = vpop.f32.mrf.mxu0
        %v413 = vadd.f32 %v368, %v412
        %414 = vmatmul.f32.gmra.mxu0 %v380
        %v415 = vpop.f32.mrf.mxu0
        %v416 = vadd.f32 %v373, %v415
        %417 = vdwg.mxu0
        %418 = vmatpush.msra.mxu0 0.0
        %419 = vmatpush.msra.mxu0 0.0
        %420 = vmatpush.msra.mxu0 0.0
        %421 = vmatpush.msra.mxu0 0.0
        %422 = vmatpush.msra.mxu0 0.0
        %423 = vmatpush.msra.mxu0 0.0
        %424 = vmatpush.msra.mxu0 0.0
        %425 = vmatpush.msra.mxu0 0.0
        %426 = vmatpush.msra.mxu0 0.0
        %427 = vmatpush.msra.mxu0 0.0
        %428 = vmatpush.msra.mxu0 0.0
        %429 = vmatpush.msra.mxu0 0.0
        %430 = vmatpush.msra.mxu0 0.0
        %431 = vmatpush.msra.mxu0 %v387
        %432 = vmatpush.msra.mxu0 %v354
        %433 = vmatpush.msra.mxu0 %v350
        %434 = vmatmul.f32.gmra.mxu0 %v377
        %v435 = vpop.f32.mrf.mxu0
        %v436 = vadd.f32 %v368, %v435
        %437 = vmatmul.f32.gmra.mxu0 %v380
        %v438 = vpop.f32.mrf.mxu0
        %v439 = vadd.f32 %v373, %v438
        %440 = vdwg.mxu0
        %441 = vmatpush.msra.mxu0 0.0
        %442 = vmatpush.msra.mxu0 0.0
        %443 = vmatpush.msra.mxu0 0.0
        %444 = vmatpush.msra.mxu0 0.0
        %445 = vmatpush.msra.mxu0 0.0
        %446 = vmatpush.msra.mxu0 0.0
        %447 = vmatpush.msra.mxu0 0.0
        %448 = vmatpush.msra.mxu0 0.0
        %449 = vmatpush.msra.mxu0 0.0
        %450 = vmatpush.msra.mxu0 0.0
        %451 = vmatpush.msra.mxu0 0.0
        %452 = vmatpush.msra.mxu0 0.0
        %453 = vmatpush.msra.mxu0 0.0
        %454 = vmatpush.msra.mxu0 %v390
        %455 = vmatpush.msra.mxu0 %v355
        %456 = vmatpush.msra.mxu0 %v351
        %457 = vmatmul.f32.gmra.mxu0 %v377
        %v458 = vpop.f32.mrf.mxu0
        %v459 = vadd.f32 %v368, %v458
        %460 = vmatmul.f32.gmra.mxu0 %v380
        %v461 = vpop.f32.mrf.mxu0
        %v462 = vadd.f32 %v373, %v461
        %463 = vdwg.mxu0
        %464 = vmatpush.msra.mxu0 0.0
        %465 = vmatpush.msra.mxu0 0.0
        %466 = vmatpush.msra.mxu0 0.0
        %467 = vmatpush.msra.mxu0 0.0
        %468 = vmatpush.msra.mxu0 0.0
        %469 = vmatpush.msra.mxu0 0.0
        %470 = vmatpush.msra.mxu0 0.0
        %471 = vmatpush.msra.mxu0 0.0
        %472 = vmatpush.msra.mxu0 0.0
        %473 = vmatpush.msra.mxu0 0.0
        %474 = vmatpush.msra.mxu0 0.0
        %475 = vmatpush.msra.mxu0 0.0
        %476 = vmatpush.msra.mxu0 0.0
        %477 = vmatpush.msra.mxu0 %v393
        %478 = vmatpush.msra.mxu0 %v356
        %479 = vmatpush.msra.mxu0 %v352
        %480 = vmatmul.f32.gmra.mxu0 %v377
        %v481 = vpop.f32.mrf.mxu0
        %v482 = vadd.f32 %v368, %v481
        %483 = vmatmul.f32.gmra.mxu0 %v380
        %v484 = vpop.f32.mrf.mxu0
        %v485 = vadd.f32 %v373, %v484
        %486 = vdwg.mxu0
        %v487 = vmax.f32 %v413, 0.0
        %v488 = vmax.f32 %v436, 0.0
        %v489 = vmax.f32 %v459, 0.0
        %v490 = vmax.f32 %v482, 0.0
        %v491 = vmax.f32 %v416, 0.0
        %v492 = vmax.f32 %v439, 0.0
        %v493 = vmax.f32 %v462, 0.0
        %v494 = vmax.f32 %v485, 0.0
        %v495 = vld [vmem:[%s5] sm:$0xff]
        %v496 = vld [vmem:[%s5 + $0x8] sm:$0x3]
        %498 = vset.pattern.permute.xlu0 0
        %499 = vperm.xlu0 %498, %v495
        %v500 = vpop.permute.xlu0 %499
        %503 = vset.pattern.permute.xlu0 0
        %504 = vperm.xlu0 %503, %v496
        %v505 = vpop.permute.xlu0 %504
        %v507 = vmul.f32 %v500, %v487
        %v508 = vmul.f32 %v500, %v488
        %v509 = vmul.f32 %v500, %v489
        %v510 = vmul.f32 %v500, %v490
        %v511 = vmul.f32 %v505, %v491
        %v512 = vmul.f32 %v505, %v492
        %v513 = vmul.f32 %v505, %v493
        %v514 = vmul.f32 %v505, %v494
        %vm515 = vcmask 1041408
        %v516 = vsel %vm515, %v511, 0.0
        %v517 = vadd.f32 %v507, %v516
        %v518 = vrot.slane %v517, 4
        %v519 = vadd.f32 %v517, %v518
        %v520 = vrot.slane %v519, 2
        %v521 = vadd.f32 %v519, %v520
        %v522 = vrot.slane %v521, 1
        %v523 = vadd.f32 %v521, %v522
        %v524 = vsel %vm515, %v512, 0.0
        %v525 = vadd.f32 %v508, %v524
        %v526 = vrot.slane %v525, 4
        %v527 = vadd.f32 %v525, %v526
        %v528 = vrot.slane %v527, 2
        %v529 = vadd.f32 %v527, %v528
        %v530 = vrot.slane %v529, 1
        %v531 = vadd.f32 %v529, %v530
        %v532 = vsel %vm515, %v513, 0.0
        %v533 = vadd.f32 %v509, %v532
        %v534 = vrot.slane %v533, 4
        %v535 = vadd.f32 %v533, %v534
        %v536 = vrot.slane %v535, 2
        %v537 = vadd.f32 %v535, %v536
        %v538 = vrot.slane %v537, 1
        %v539 = vadd.f32 %v537, %v538
        %v540 = vsel %vm515, %v514, 0.0
        %v541 = vadd.f32 %v510, %v540
        %v542 = vrot.slane %v541, 4
        %v543 = vadd.f32 %v541, %v542
        %v544 = vrot.slane %v543, 2
        %v545 = vadd.f32 %v543, %v544
        %v546 = vrot.slane %v545, 1
        %v547 = vadd.f32 %v545, %v546
        %v548 = vld [vmem:[#allocation2] sm:$0x1]
        %550 = vset.pattern.permute.xlu0 0
        %551 = vperm.xlu0 %550, %v548
        %v552 = vpop.permute.xlu0 %551
        %v554 = vperm.slane %v552, 0
        %v555 = vadd.f32 %v523, %v554
        %v556 = vadd.f32 %v531, %v554
        %v557 = vadd.f32 %v539, %v554
        %v558 = vadd.f32 %v547, %v554
        %v563 = vrot.slane %v556, 7
        %v564 = vrot.slane %v557, 6
        %v565 = vrot.slane %v558, 5
        %vm566 = vcmask 1040384
        %v567 = vsel %vm566, %v555, %v563
        %vm568 = vcmask 1042434
        %v569 = vsel %vm568, %v564, %v565
        %v570 = vsel %vm515, %v567, %v569
        %v572 = vlaneseq
        %vm573 = vcmp.ge.s32.totalorder %v572, 0
        %vm574 = vcmp.lt.s32.totalorder %v572, 512
        %vm575 = vmand %vm573, %vm574
        %576 = vst.msk [vmem:[%s272] sm:$0xf] %vm575, %v570
        %s577 = sand.u32 %s183, 1
        %s578 = scalar_lea.sflag [#allocation4], %s577
        %s579 = sand.u32 %s183, 1
        %s580 = smul.addr %s579, 4
        %s581 = scalar_lea.vmem [#allocation3], %s580
        // Predicated region
        $region49: #{tpu_custom_call.1} parent=47 // pred_check
          %p582 = pneg %p193
        $region50: #{tpu_custom_call.1} parent=47 // pred_check_branch
          %584 = sbr.rel (%p582) target = $region52
        $region51: #{tpu_custom_call.1} parent=47 // pred_region
          %s585 = smul.u32 4, %s23
          %587 = vsyncadd %s578, 0
          %s588 = scalar_lea.hbm %s7, %s585
          %s590 = sshll.u32 %s581, 4
          %s591 = int_to_ptr.vmem [resolvable:$true] %s590
          %s592 = sshll.u32 %s588, 4
          %s593 = int_to_ptr.hbm [resolvable:$true] %s592
          %595 = dma.vmem_to_hbm [thread:$0]  %s591, 64, %s593, %s578
        $region52: #{tpu_custom_call.1} parent=47 // pred_fallthru
          _
      $region48: #{tpu_custom_call.1} parent=5 // pred_fallthru
        _
      %p596 = scmp.le.s32.totalorder 2, %s18
      // Predicated region
      $region53: #{tpu_custom_call.1} parent=5 // pred_check
        %p597 = pneg %p596
      $region54: #{tpu_custom_call.1} parent=5 // pred_check_branch
        %599 = sbr.rel (%p597) target = $region56
      $region55: #{tpu_custom_call.1} parent=5 // pred_region
        %s600 = ssub.s32 %s18, 2
        // Predicated region
        $region57: #{tpu_custom_call.1} parent=55 // pred_check
          %p601 = pneg %p199
        $region58: #{tpu_custom_call.1} parent=55 // pred_check_branch
          %603 = sbr.rel (%p601) target = $region60
        $region59: #{tpu_custom_call.1} parent=55 // pred_region
          %s604 = sand.u32 %s184, 1
          %s605 = scalar_lea.sflag [#allocation4], %s604
          %s606 = sand.u32 %s184, 1
          %s607 = smul.addr %s606, 4
          %s608 = scalar_lea.vmem [#allocation3], %s607
          %610 = dma.done %s605, 64
        $region60: #{tpu_custom_call.1} parent=55 // pred_fallthru
          _
      $region56: #{tpu_custom_call.1} parent=5 // pred_fallthru
        _
    $region6: #{tpu_custom_call.1} parent=1 // loop_footer
      %s22 = sadd.s32 1, %s18
    $region7: #{tpu_custom_call.1} parent=1 // loop_footer_branch
      %17 = sbr.rel target = $region3
    $region8: #{tpu_custom_call.1} parent=1 // loop_exit
      _
    %611 = vsyncpa [#allocation4], 1
    %s612 = scalar_lea.sflag [#allocation4], 1
    %613 = vsyncpa %s612, 1

</llo_original>
